<compile_context>
chip_gen: v7x
topology: tpu7x:2x2x1
jax: 0.10.0
libtpu: 0.0.40
codegen_flags: <defaults>
</compile_context>

<pallas_src>
import jax
import jax.numpy as jnp
from jax.experimental import pallas as pl
from jax.experimental.pallas import tpu as pltpu


def _adaptive_pool_matrix(in_size: int, out_size: int) -> jnp.ndarray:
    """Exact adaptive-avg-pool reduction matrix (out_size, in_size), float32."""
    i = jnp.arange(out_size)
    starts = (i * in_size) // out_size                # floor(i*S/k)
    ends = -((-(i + 1) * in_size) // out_size)        # ceil((i+1)*S/k)
    pos = jnp.arange(in_size)
    member = (pos[None, :] >= starts[:, None]) & (pos[None, :] < ends[:, None])
    counts = (ends - starts).astype(jnp.float32)
    return member.astype(jnp.float32) / counts[:, None]


def _pool_kernel(x_ref, m_ref, p_ref, o_ref):
    # x_ref: (c_blk, HWp)   input slab for one batch element / channel block (native dtype)
    # m_ref: (M, HWp)       all masks for this batch element (channel-independent)
    # p_ref: (kk, HWp)      pooling matrix, float32, grid-invariant
    # o_ref: (M*kk, c_blk)  lane-dense output block (channels on the lane axis)
    num_masks, hwp = m_ref.shape
    kk = p_ref.shape[0]
    # Fold ALL masks into the pooling weights: (M, kk, HWp) -> (M*kk, HWp).
    # TODO(synk): if C // c_blk is large, hoist this per-n fold into a VMEM scratch under
    # pl.when(cb == 0) (requires marking the cb grid axis "arbitrary").
    wm = p_ref[...][None, :, :] * m_ref[...].astype(jnp.float32)[:, None, :]
    wm = wm.reshape(num_masks * kk, hwp).astype(x_ref.dtype)
    out = jax.lax.dot_general(                        # (M*kk, HWp) x (c_blk, HWp)^T
        wm, x_ref[...], (((1,), (1,)), ((), ())),
        preferred_element_type=jnp.float32)           # -> (M*kk, c_blk), f32 accumulation
    o_ref[...] = out.astype(o_ref.dtype)


def _vmem_capacity_bytes() -> int:
    try:
        return int(pltpu.get_tpu_info().vmem_capacity_bytes)
    except Exception:
        return 64 << 20                               # conservative default (v7x per-TC VMEM)


def _choose_c_block(N, C, M, kk, hw_pad, itemsize, vmem_limit_bytes):
    """Largest channel block whose full pipeline footprint fits the VMEM budget.

    Legal blocks are C itself or 128-aligned divisors of C (lane-dense output + (8,128)
    tiling rule).  Hard-falls-back to the smallest legal block instead of silently
    requesting an oversized slab.
    """
    cands = sorted({C} | {d for d in range(128, C, 128) if C % d == 0})
    fixed = (2 * M * hw_pad * itemsize                # masks, double-buffered
             + 2 * kk * hw_pad * 4                    # pooling matrix (f32), double-buffered
             + M * kk * hw_pad * (4 + itemsize))      # in-kernel wm fold: f32 product + cast
    per_c = (2 * hw_pad * itemsize                    # x slab, double-buffered
             + 2 * M * kk * itemsize                  # output block, double-buffered
             + M * kk * 4)                            # f32 matmul result
    budget = int(0.75 * vmem_limit_bytes) - fixed
    fits = [d for d in cands if d * per_c <= budget]
    if not fits:
        return cands[0]
    if N == 1:                                        # v7x megacore: give both TCs grid work
        split = [d for d in fits if C // d >= 2]
        if split:
            return max(split)
    return max(fits)


def selective_adaptive_avg_pool2d(x, masks, kernel_size):
    """JAX/Pallas equivalent of SelectiveAdaptiveAvgPool2d.forward(x, masks)."""
    N, C, H, W = x.shape
    k = kernel_size
    kk = k * k
    hw = H * W
    M = len(masks)

    # (k*k, H*W) pooling matrix in float32.
    ph = _adaptive_pool_matrix(H, k)                           # (k, H)
    pw = _adaptive_pool_matrix(W, k)                           # (k, W)
    p = jnp.einsum("ih,jw->ijhw", ph, pw).reshape(kk, hw)      # (k*k, H*W)

    # MixMo masks are (N, 1, H, W) (channel-independent): never materialize an
    # (N, C, H, W) broadcast in HBM.
    # TODO(synk): per-channel masks (channel dim > 1) would need a per-channel weight path.
    stacked = []
    for m in masks:
        m = jnp.asarray(m)
        if m.ndim == 4 and m.shape[1] != 1:
            raise NotImplementedError(
                "Pallas SelectiveAdaptiveAvgPool2d assumes channel-independent masks of "
                f"shape (N, 1, H, W); got {m.shape}.")
        stacked.append(jnp.broadcast_to(m, (N, 1, H, W)).reshape(N, hw))
    masks_arr = jnp.stack(stacked, axis=1).astype(x.dtype)     # (N, M, H*W)

    x2 = x.reshape(N, C, hw)                                   # contiguous collapse

    # Zero-pad H*W to a multiple of 128 (exact: padded pooling columns are zero).
    hw_pad = ((hw + 127) // 128) * 128
    if hw_pad != hw:
        pad = hw_pad - hw
        x2 = jnp.pad(x2, ((0, 0), (0, 0), (0, pad)))
        masks_arr = jnp.pad(masks_arr, ((0, 0), (0, 0), (0, pad)))
        p = jnp.pad(p, ((0, 0), (0, pad)))

    vmem_limit = min(int(0.75 * _vmem_capacity_bytes()), 96 << 20)
    c_blk = _choose_c_block(N, C, M, kk, hw_pad, x.dtype.itemsize, vmem_limit)
    grid = (N, C // c_blk)

    out = pl.pallas_call(
        _pool_kernel,
        out_shape=jax.ShapeDtypeStruct((N, M * kk, C), x.dtype),
        grid_spec=pl.GridSpec(
            grid=grid,
            in_specs=[
                pl.BlockSpec((pl.Squeezed(), c_blk, hw_pad), lambda n, cb: (n, cb, 0)),
                pl.BlockSpec((pl.Squeezed(), M, hw_pad), lambda n, cb: (n, 0, 0)),
                pl.BlockSpec((kk, hw_pad), lambda n, cb: (0, 0)),
            ],
            out_specs=pl.BlockSpec((pl.Squeezed(), M * kk, c_blk),
                                   lambda n, cb: (n, 0, cb)),
        ),
        compiler_params=pltpu.CompilerParams(
            dimension_semantics=("parallel", "parallel"),
            vmem_limit_bytes=vmem_limit),
    )(x2, masks_arr, p)

    # (N, M*kk, C) -> list of M tensors (N, C, k, k); transposes done once by XLA.
    out = out.reshape(N, M, kk, C)
    return [jnp.transpose(out[:, m], (0, 2, 1)).reshape(N, C, k, k) for m in range(M)]


def _reference(x, masks, kernel_size):
    """Pure-JAX reference for AdaptiveAvgPool2d((k,k)) of x*mask (correctness check)."""
    ph = _adaptive_pool_matrix(x.shape[2], kernel_size)
    pw = _adaptive_pool_matrix(x.shape[3], kernel_size)
    outs = []
    for mask in masks:
        xm = (x * jnp.broadcast_to(mask, x.shape)).astype(jnp.float32)
        outs.append(jnp.einsum("oh,nchw,pw->ncop", ph, xm, pw).astype(x.dtype))
    return outs


if __name__ == "__main__":
    key = jax.random.PRNGKey(0)
    k_x, k_m0, k_m1 = jax.random.split(key, 3)

    N, C, H, W = 2, 4, 16, 16
    kernel_size = 4

    x = jax.random.normal(k_x, (N, C, H, W), dtype=jnp.float32)
    # Two binary masks, shaped (N, 1, H, W), broadcast over channels (MixMo-style).
    masks = [
        (jax.random.uniform(k_m0, (N, 1, H, W)) > 0.5).astype(jnp.float32),
        (jax.random.uniform(k_m1, (N, 1, H, W)) > 0.5).astype(jnp.float32),
    ]

    outs = selective_adaptive_avg_pool2d(x, masks, kernel_size)
    outs = [jax.block_until_ready(o) for o in outs]

    refs = _reference(x, masks, kernel_size)
    for o, r in zip(outs, refs):
        assert o.shape == (N, C, kernel_size, kernel_size)
        assert jnp.allclose(o, r, atol=1e-5, rtol=1e-5)

    print("KERNEL_OK")
</pallas_src>

<mosaic_0001>
module attributes {stable_mosaic.version = 11 : i64} {
  func.func @_pool_kernel(%arg0: i32, %arg1: i32, %arg2: memref<1x4x256xf32, #tpu.memory_space<vmem>>, %arg3: memref<1x2x256xf32, #tpu.memory_space<vmem>>, %arg4: memref<16x256xf32, #tpu.memory_space<vmem>>, %arg5: memref<1x32x4xf32, #tpu.memory_space<vmem>>) attributes {dimension_semantics = [#tpu.dimension_semantics<parallel>, #tpu.dimension_semantics<parallel>], iteration_bounds = array<i64: 2, 1>, scalar_prefetch = 0 : i64, scratch_operands = 0 : i64, tpu.core_type = #tpu.core_type<tc>, window_params = [{transform_indices = @transform_0, window_bounds = array<i64: 1, 4, 256>}, {transform_indices = @transform_1, window_bounds = array<i64: 1, 2, 256>}, {pipeline_mode = #tpu.pipeline_mode<synchronous>, transform_indices = @transform_2, window_bounds = array<i64: 16, 256>}, {transform_indices = @transform_3, window_bounds = array<i64: 1, 32, 4>}]} {
    %c0 = arith.constant 0 : index
    %c0_0 = arith.constant 0 : index
    %0 = vector.load %arg4[%c0, %c0_0] : memref<16x256xf32, #tpu.memory_space<vmem>>, vector<16x256xf32>
    %1 = vector.shape_cast %0 : vector<16x256xf32> to vector<1x16x256xf32>
    %c0_1 = arith.constant 0 : index
    %c0_2 = arith.constant 0 : index
    %c0_3 = arith.constant 0 : index
    %2 = vector.load %arg3[%c0_1, %c0_2, %c0_3] : memref<1x2x256xf32, #tpu.memory_space<vmem>>, vector<1x2x256xf32>
    %3 = vector.shape_cast %2 : vector<1x2x256xf32> to vector<2x256xf32>
    %4 = vector.shape_cast %3 : vector<2x256xf32> to vector<2x1x256xf32>
    %5 = vector.broadcast %1 : vector<1x16x256xf32> to vector<2x16x256xf32>
    %6 = vector.broadcast %4 : vector<2x1x256xf32> to vector<2x16x256xf32>
    %7 = arith.mulf %5, %6 : vector<2x16x256xf32>
    %8 = vector.shape_cast %7 : vector<2x16x256xf32> to vector<32x256xf32>
    %c0_4 = arith.constant 0 : index
    %c0_5 = arith.constant 0 : index
    %c0_6 = arith.constant 0 : index
    %9 = vector.load %arg2[%c0_4, %c0_5, %c0_6] : memref<1x4x256xf32, #tpu.memory_space<vmem>>, vector<1x4x256xf32>
    %10 = vector.shape_cast %9 : vector<1x4x256xf32> to vector<4x256xf32>
    %cst = arith.constant dense<0.000000e+00> : vector<32x4xf32>
    %11 = tpu.matmul %8, %10, %cst {dimension_numbers = #tpu.dot_dimension_numbers<[1], [1], [0], [0], [0, 0, 1, 0], [], []>} : vector<32x256xf32>, vector<4x256xf32>, vector<32x4xf32> -> vector<32x4xf32>
    %c0_7 = arith.constant 0 : index
    %c0_8 = arith.constant 0 : index
    %c0_9 = arith.constant 0 : index
    %12 = vector.load %arg5[%c0_7, %c0_8, %c0_9] : memref<1x32x4xf32, #tpu.memory_space<vmem>>, vector<1x32x4xf32>
    %13 = vector.shape_cast %12 : vector<1x32x4xf32> to vector<32x4xf32>
    %14 = vector.shape_cast %11 : vector<32x4xf32> to vector<1x32x4xf32>
    tpu.vector_store %arg5[%c0_7, %c0_8, %c0_9], %14 {strides = array<i32>} : memref<1x32x4xf32, #tpu.memory_space<vmem>>, vector<1x32x4xf32>,
    return
  }
  func.func @transform_0(%arg0: i32, %arg1: i32) -> (i32, i32, i32) {
    %c0_i32 = arith.constant 0 : i32
    %c0_i32_0 = arith.constant 0 : i32
    return %arg0, %arg1, %c0_i32 : i32, i32, i32
  }
  func.func @transform_1(%arg0: i32, %arg1: i32) -> (i32, i32, i32) {
    %c0_i32 = arith.constant 0 : i32
    %c0_i32_0 = arith.constant 0 : i32
    %c0_i32_1 = arith.constant 0 : i32
    return %arg0, %c0_i32, %c0_i32_0 : i32, i32, i32
  }
  func.func @transform_2(%arg0: i32, %arg1: i32) -> (i32, i32) {
    %c0_i32 = arith.constant 0 : i32
    %c0_i32_0 = arith.constant 0 : i32
    %c0_i32_1 = arith.constant 0 : i32
    return %c0_i32, %c0_i32_0 : i32, i32
  }
  func.func @transform_3(%arg0: i32, %arg1: i32) -> (i32, i32, i32) {
    %c0_i32 = arith.constant 0 : i32
    %c0_i32_0 = arith.constant 0 : i32
    return %arg0, %c0_i32, %arg1 : i32, i32, i32
  }
}

</mosaic_0001>

<llo_original>
// kernel: tpu_custom_call.1
$region0: #{tpu_custom_call.1}
  #allocation0 [shape = 'u32[]', space=smem, size = 0x4, offset = 0x4, fixed_abs, tag = 'smem constant byte address 0x4 - core index']
  #allocation1 [shape = 'u32[144,128]{1,0:T(1,128)}', space=vmem, size = 0x12000, scoped, tag = 'internal scratch']
  %s0 = inlined_call_operand.hbm [shape: f32[2,4,256], index: 0, kind: input, shape index: {}]
  %s1 = inlined_call_operand.hbm [shape: f32[2,2,256], index: 1, kind: input, shape index: {}]
  %s2 = inlined_call_operand.hbm [shape: f32[16,256], index: 2, kind: input, shape index: {}]
  %s3 = inlined_call_operand.vmem [shape: f32[2,32,4], index: 3, kind: output, shape index: {}]
  %s4 = sld [smem:[#allocation0]]
  $region57: #{tpu_custom_call.1} parent=0
    _
  %s6 = ssub.s32 1, %s4
  %s7 = scalar_select 0, %s6, %s4
  $region1: #{tpu_custom_call.1} parent=0
    #allocation2 [shape = 'u8[8192]{0}', space=vmem, size = 0x2000, scoped, tag = 'input window, operand 0']
    #allocation3 [shape = 's32[2]{0}', space=sflag, size = 0x8, scoped, tag = 'scoped memory for tpu_custom_call.1']
    #allocation4 [shape = 'u8[4096]{0}', space=vmem, size = 0x1000, scoped, tag = 'input window, operand 1']
    #allocation5 [shape = 's32[2]{0}', space=sflag, size = 0x8, scoped, tag = 'scoped memory for tpu_custom_call.1']
    #allocation6 [shape = 'u8[16384]{0}', space=vmem, size = 0x4000, scoped, tag = 'input window, operand 2, single buffered']
    %8 = vsyncpa [#allocation3], 0
    %s9 = scalar_lea.sflag [#allocation3], 1
    %10 = vsyncpa %s9, 0
    %11 = vsyncpa [#allocation5], 0
    %s12 = scalar_lea.sflag [#allocation5], 1
    %13 = vsyncpa %s12, 0
    loop: start=0, step=1, limit=4
    $region2: #{tpu_custom_call.1} parent=1 // loop_pre_header
      _
    $region3: #{tpu_custom_call.1} parent=1 // loop_header
      %s15 = sphi 0, %s19
      %p16 = scmp.ge.s32.totalorder %s15, 4
      %s22 = sphi 0, %s34
      %s23 = sphi 0, %s30
      %s24 = sphi 0, %s22
      %s25 = sphi 0, %s23
      %s26 = sphi 0, %s24
      %s27 = sphi 0, %s25
      %s39 = sphi 0, %s41
      %s42 = sphi 0, %s39
      %s43 = sphi 0, %s42
      %s59 = sphi 0, %s43
      %s65 = sphi 0, %s67
      %s68 = sphi 0, %s65
      %s69 = sphi 0, %s68
      %s85 = sphi 0, %s69
      %s89 = sphi 0, %s89
      %s91 = sphi 0, %s89
      %s92 = sphi 0, %s91
      %s106 = sphi 0, %s92
      %s114 = sphi 0, %s116
      %s117 = sphi 0, %s114
      %s118 = sphi 0, %s117
      %s134 = sphi 0, %s118
    $region4: #{tpu_custom_call.1} parent=1 // loop_header_branch
      %18 = sbr.rel (%p16) target = $region8
    $region5: #{tpu_custom_call.1} parent=1 // loop_body
      %s20 = ssub.s32 %s15, 1
      %s21 = ssub.s32 %s15, 2
      %s28 = sadd.s32 1, %s23
      %p29 = scmp.ge.s32.totalorder %s28, 1
      %s30 = scalar_select %p29, 0, %s28
      %s31 = sadd.s32 1, %s22
      %s32 = scalar_select %p29, %s31, %s22
      %p33 = scmp.ge.s32.totalorder %s32, 2
      %s34 = scalar_select %p33, 0, %s32
      %s35 = ssub.s32 %s22, %s34
      %s36 = ssub.s32 %s23, %s30
      %s37 = sor.u32 %s35, %s36
      %p38 = scmp.eq.s32.totalorder %s37, 0
      %s40 = sadd.s32 %s39, 1
      %s41 = scalar_select %p38, %s39, %s40
      %p44 = pneg %p38
      %p45 = scmp.eq.s32.totalorder %s15, 1
      %p46 = por %p44, %p45
      %p47 = scmp.ne.s32.totalorder %s39, %s42
      %p48 = scmp.eq.s32.totalorder %s15, 0
      %p49 = por %p47, %p48
      %p50 = scmp.ne.s32.totalorder %s39, %s42
      %p51 = scmp.eq.s32.totalorder %s20, 1
      %p52 = por %p50, %p51
      %p53 = scmp.ne.s32.totalorder %s42, %s43
      %p54 = scmp.eq.s32.totalorder %s20, 0
      %p55 = por %p53, %p54
      %p56 = scmp.ne.s32.totalorder %s42, %s43
      %p57 = scmp.eq.s32.totalorder %s21, 1
      %p58 = por %p56, %p57
      %p60 = scmp.ne.s32.totalorder %s43, %s59
      %p61 = scmp.eq.s32.totalorder %s21, 0
      %p62 = por %p60, %p61
      %s63 = ssub.s32 %s22, %s34
      %p64 = scmp.eq.s32.totalorder %s63, 0
      %s66 = sadd.s32 %s65, 1
      %s67 = scalar_select %p64, %s65, %s66
      %p70 = pneg %p64
      %p71 = scmp.eq.s32.totalorder %s15, 1
      %p72 = por %p70, %p71
      %p73 = scmp.ne.s32.totalorder %s65, %s68
      %p74 = scmp.eq.s32.totalorder %s15, 0
      %p75 = por %p73, %p74
      %p76 = scmp.ne.s32.totalorder %s65, %s68
      %p77 = scmp.eq.s32.totalorder %s20, 1
      %p78 = por %p76, %p77
      %p79 = scmp.ne.s32.totalorder %s68, %s69
      %p80 = scmp.eq.s32.totalorder %s20, 0
      %p81 = por %p79, %p80
      %p82 = scmp.ne.s32.totalorder %s68, %s69
      %p83 = scmp.eq.s32.totalorder %s21, 1
      %p84 = por %p82, %p83
      %p86 = scmp.ne.s32.totalorder %s69, %s85
      %p87 = scmp.eq.s32.totalorder %s21, 0
      %p88 = por %p86, %p87
      %s90 = sadd.s32 %s89, 1
      %p93 = scmp.eq.s32.totalorder %s15, 1
      %p94 = scmp.ne.s32.totalorder %s89, %s91
      %p95 = scmp.eq.s32.totalorder %s15, 0
      %p96 = por %p94, %p95
      %p97 = scmp.ne.s32.totalorder %s89, %s91
      %p98 = scmp.eq.s32.totalorder %s20, 1
      %p99 = por %p97, %p98
      %p100 = scmp.ne.s32.totalorder %s91, %s92
      %p101 = scmp.eq.s32.totalorder %s20, 0
      %p102 = por %p100, %p101
      %p103 = scmp.ne.s32.totalorder %s91, %s92
      %p104 = scmp.eq.s32.totalorder %s21, 1
      %p105 = por %p103, %p104
      %p107 = scmp.ne.s32.totalorder %s92, %s106
      %p108 = scmp.eq.s32.totalorder %s21, 0
      %p109 = por %p107, %p108
      %s110 = ssub.s32 %s22, %s34
      %s111 = ssub.s32 %s23, %s30
      %s112 = sor.u32 %s110, %s111
      %p113 = scmp.eq.s32.totalorder %s112, 0
      %s115 = sadd.s32 %s114, 1
      %s116 = scalar_select %p113, %s114, %s115
      %p119 = pneg %p113
      %p120 = scmp.eq.s32.totalorder %s15, 1
      %p121 = por %p119, %p120
      %p122 = scmp.ne.s32.totalorder %s114, %s117
      %p123 = scmp.eq.s32.totalorder %s15, 0
      %p124 = por %p122, %p123
      %p125 = scmp.ne.s32.totalorder %s114, %s117
      %p126 = scmp.eq.s32.totalorder %s20, 1
      %p127 = por %p125, %p126
      %p128 = scmp.ne.s32.totalorder %s117, %s118
      %p129 = scmp.eq.s32.totalorder %s20, 0
      %p130 = por %p128, %p129
      %p131 = scmp.ne.s32.totalorder %s117, %s118
      %p132 = scmp.eq.s32.totalorder %s21, 1
      %p133 = por %p131, %p132
      %p135 = scmp.ne.s32.totalorder %s118, %s134
      %p136 = scmp.eq.s32.totalorder %s21, 0
      %p137 = por %p135, %p136
      %p138 = scmp.le.s32.totalorder 1, %s15
      %p139 = scmp.lt.s32.totalorder %s15, 3
      %p140 = pnand %p138, %p139
      %p141 = pneg %p140
      // Predicated region
      $region9: #{tpu_custom_call.1} parent=5 // pred_check
        _
      $region10: #{tpu_custom_call.1} parent=5 // pred_check_branch
        %143 = sbr.rel (%p140) target = $region12
      $region11: #{tpu_custom_call.1} parent=5 // pred_region
        %s144 = ssub.s32 %s15, 1
        // Predicated region
        $region13: #{tpu_custom_call.1} parent=11 // pred_check
          %p145 = pneg %p102
        $region14: #{tpu_custom_call.1} parent=11 // pred_check_branch
          %147 = sbr.rel (%p145) target = $region16
        $region15: #{tpu_custom_call.1} parent=11 // pred_region
          %s149 = ssub.s32 512, 512
          %150 = vsyncadd [#allocation5], %s149
          %s151 = sshll.u32 [#allocation6], 4
          %s152 = int_to_ptr.vmem [resolvable:$true] %s151
          %157 = dma.hbm_to_vmem [thread:$0]  %s2, 512, %s152, [#allocation5], 256, 256, 16
        $region16: #{tpu_custom_call.1} parent=11 // pred_fallthru
          _
      $region12: #{tpu_custom_call.1} parent=5 // pred_fallthru
        _
      %p158 = scmp.lt.s32.totalorder %s15, 2
      // Predicated region
      $region17: #{tpu_custom_call.1} parent=5 // pred_check
        %p159 = pneg %p158
      $region18: #{tpu_custom_call.1} parent=5 // pred_check_branch
        %161 = sbr.rel (%p159) target = $region20
      $region19: #{tpu_custom_call.1} parent=5 // pred_region
        // Predicated region
        $region21: #{tpu_custom_call.1} parent=19 // pred_check
          %p162 = pneg %p49
        $region22: #{tpu_custom_call.1} parent=19 // pred_check_branch
          %164 = sbr.rel (%p162) target = $region24
        $region23: #{tpu_custom_call.1} parent=19 // pred_region
          %s165 = sand.u32 %s39, 1
          %s166 = scalar_lea.sflag [#allocation3], %s165
          %s167 = sand.u32 %s39, 1
          %s168 = smul.addr %s167, 8
          %s169 = scalar_lea.vmem [#allocation2], %s168
          %s171 = ssub.s32 128, 128
          %172 = vsyncadd %s166, %s171
          %s173 = smul.addr %s23, 2
          %s174 = smul.addr %s22, 2
          %s175 = sadd.s32 %s173, %s174
          %s176 = smul.addr %s175, 64
          %s177 = scalar_lea.hbm %s0, %s176
          %s179 = sshll.u32 %s169, 4
          %s180 = int_to_ptr.vmem [resolvable:$true] %s179
          %182 = dma.hbm_to_vmem [thread:$0]  %s177, 128, %s180, %s166
        $region24: #{tpu_custom_call.1} parent=19 // pred_fallthru
          _
        // Predicated region
        $region25: #{tpu_custom_call.1} parent=19 // pred_check
          %p183 = pneg %p75
        $region26: #{tpu_custom_call.1} parent=19 // pred_check_branch
          %185 = sbr.rel (%p183) target = $region28
        $region27: #{tpu_custom_call.1} parent=19 // pred_region
          %s186 = sand.u32 %s15, 1
          %s187 = scalar_lea.sflag [#allocation5], %s186
          %s188 = sand.u32 %s65, 1
          %s189 = smul.addr %s188, 4
          %s190 = scalar_lea.vmem [#allocation4], %s189
          %s192 = ssub.s32 64, 64
          %193 = vsyncadd %s187, %s192
          %s194 = smul.addr %s22, 2
          %s195 = smul.addr %s194, 32
          %s196 = scalar_lea.hbm %s1, %s195
          %s198 = sshll.u32 %s190, 4
          %s199 = int_to_ptr.vmem [resolvable:$true] %s198
          %201 = dma.hbm_to_vmem [thread:$0]  %s196, 64, %s199, %s187
        $region28: #{tpu_custom_call.1} parent=19 // pred_fallthru
          _
      $region20: #{tpu_custom_call.1} parent=5 // pred_fallthru
        _
      %p202 = scmp.le.s32.totalorder 1, %s15
      %p203 = scmp.lt.s32.totalorder %s15, 3
      %p204 = pnand %p202, %p203
      %p205 = pneg %p204
      // Predicated region
      $region29: #{tpu_custom_call.1} parent=5 // pred_check
        _
      $region30: #{tpu_custom_call.1} parent=5 // pred_check_branch
        %207 = sbr.rel (%p204) target = $region32
      $region31: #{tpu_custom_call.1} parent=5 // pred_region
        %s208 = ssub.s32 %s15, 1
        %s209 = sand.u32 %s42, 1
        %s210 = scalar_lea.sflag [#allocation3], %s209
        %s211 = sand.u32 %s42, 1
        %s212 = smul.addr %s211, 8
        %s213 = scalar_lea.vmem [#allocation2], %s212
        // Predicated region
        $region33: #{tpu_custom_call.1} parent=31 // pred_check
          %p214 = pneg %p55
        $region34: #{tpu_custom_call.1} parent=31 // pred_check_branch
          %216 = sbr.rel (%p214) target = $region36
        $region35: #{tpu_custom_call.1} parent=31 // pred_region
          %217 = dma.done %s210, 128
        $region36: #{tpu_custom_call.1} parent=31 // pred_fallthru
          _
        %s218 = sand.u32 %s20, 1
        %s219 = scalar_lea.sflag [#allocation5], %s218
        %s220 = sand.u32 %s68, 1
        %s221 = smul.addr %s220, 4
        %s222 = scalar_lea.vmem [#allocation4], %s221
        // Predicated region
        $region37: #{tpu_custom_call.1} parent=31 // pred_check
          %p223 = pneg %p81
        $region38: #{tpu_custom_call.1} parent=31 // pred_check_branch
          %225 = sbr.rel (%p223) target = $region40
        $region39: #{tpu_custom_call.1} parent=31 // pred_region
          %226 = dma.done %s219, 64
        $region40: #{tpu_custom_call.1} parent=31 // pred_fallthru
          _
        // Predicated region
        $region41: #{tpu_custom_call.1} parent=31 // pred_check
          %p227 = pneg %p102
        $region42: #{tpu_custom_call.1} parent=31 // pred_check_branch
          %229 = sbr.rel (%p227) target = $region44
        $region43: #{tpu_custom_call.1} parent=31 // pred_region
          %230 = dma.done [#allocation5], 512
        $region44: #{tpu_custom_call.1} parent=31 // pred_fallthru
          _
        %s231 = sand.u32 %s42, 1
        %s232 = scalar_lea.sflag [#allocation3], %s231
        %s233 = sand.u32 %s42, 1
        %s234 = smul.addr %s233, 8
        %s235 = scalar_lea.vmem [#allocation2], %s234
        %p236 = pneg %p55
        %p237 = pneg %p52
        %s238 = sand.u32 %s20, 1
        %s239 = scalar_lea.sflag [#allocation5], %s238
        %s240 = sand.u32 %s68, 1
        %s241 = smul.addr %s240, 4
        %s242 = scalar_lea.vmem [#allocation4], %s241
        %p243 = pneg %p81
        %p244 = pneg %p78
        %p245 = pneg %p102
        %p246 = pneg %p99
        %p247 = pneg %p130
        %p248 = pneg %p127
        %p249 = scmp.lt.s32.totalorder %s24, 1
        %s250 = scalar_select %p249, %s24, 1
        %p251 = scmp.lt.s32.totalorder %s25, 0
        %s252 = scalar_select %p251, %s25, 0
        %s253 = smul.addr %s250, 4
        %s254 = sadd.s32 %s252, %s253
        %s255 = smul.addr %s254, 8
        %s256 = scalar_lea.vmem %s3, %s255
        %p257 = scmp.lt.s32.totalorder %s24, 1
        %s258 = scalar_select %p257, %s24, 1
        %p259 = scmp.lt.s32.totalorder %s25, 0
        %s260 = scalar_select %p259, %s25, 0
        %s261 = smul.addr %s258, 4
        %s262 = sadd.s32 %s260, %s261
        %s263 = smul.addr %s262, 8
        %s264 = scalar_lea.vmem %s3, %s263
        %v265 = vld [vmem:[#allocation6] sm:$0xff]
        %v266 = vld [vmem:[#allocation6 + $0x8] sm:$0xff]
        %v267 = vld [vmem:[#allocation6 + $0x10] sm:$0xff]
        %v268 = vld [vmem:[#allocation6 + $0x18] sm:$0xff]
        %v269 = vld [vmem:[%s222] sm:$0xf]
        %v272 = vunpack.c.l.s4 1966171168
        %v273 = vunpack.c.0.s8 %v272
        %v274 = vlaneseq
        %v275 = vshrl.u32 %v274, 7
        %v276 = vsub.s32 %v273, %v275
        %v277 = vrot.slane %v269, %v276
        %v278 = vcombine.high %v277, %v277
        %v279 = vlaneseq
        %v280 = vshrl.u32 %v279, 7
        %v281 = vsub.s32 0, %v280
        %v282 = vrot.slane %v277, %v281
        %v283 = vlaneseq
        %v284 = vshrl.u32 %v283, 7
        %v285 = vsub.s32 1, %v284
        %v286 = vrot.slane %v277, %v285
        %v287 = vlaneseq
        %v288 = vshrl.u32 %v287, 7
        %v289 = vsub.s32 0, %v288
        %v290 = vrot.slane %v278, %v289
        %v291 = vlaneseq
        %v292 = vshrl.u32 %v291, 7
        %v293 = vsub.s32 1, %v292
        %v294 = vrot.slane %v278, %v293
        %v299 = vmul.f32 %v265, %v282
        %v300 = vmul.f32 %v266, %v286
        %v301 = vmul.f32 %v267, %v282
        %v302 = vmul.f32 %v268, %v286
        %v303 = vmul.f32 %v265, %v290
        %v304 = vmul.f32 %v266, %v294
        %v305 = vmul.f32 %v267, %v290
        %v306 = vmul.f32 %v268, %v294
        %v307 = vld [vmem:[%s213] sm:$0xff]
        %v309 = vcombine.high %v307, %v307
        %311 = vmatprep.subr.mxu0 %v309
        %312 = vmatpush1.xpose.msra.mxu0 %v307
        %313 = vmatprep.subr.mxu0 0.0
        %314 = vmatpush1.xpose.msra.mxu0 0.0
        %315 = vmatprep.subr.mxu0 0.0
        %316 = vmatpush1.xpose.msra.mxu0 0.0
        %317 = vmatprep.subr.mxu0 0.0
        %318 = vmatpush1.xpose.msra.mxu0 0.0
        %319 = vmatprep.subr.mxu0 0.0
        %320 = vmatpush1.xpose.msra.mxu0 0.0
        %321 = vmatprep.subr.mxu0 0.0
        %322 = vmatpush1.xpose.msra.mxu0 0.0
        %323 = vmatprep.subr.mxu0 0.0
        %324 = vmatpush1.xpose.msra.mxu0 0.0
        %325 = vmatprep.subr.mxu0 0.0
        %326 = vmatpush1.xpose.msra.mxu0 0.0
        %327 = vmatprep.subr.mxu0 0.0
        %328 = vmatpush1.xpose.msra.mxu0 0.0
        %329 = vmatprep.subr.mxu0 0.0
        %330 = vmatpush1.xpose.msra.mxu0 0.0
        %331 = vmatprep.subr.mxu0 0.0
        %332 = vmatpush1.xpose.msra.mxu0 0.0
        %333 = vmatprep.subr.mxu0 0.0
        %334 = vmatpush1.xpose.msra.mxu0 0.0
        %335 = vmatprep.subr.mxu0 0.0
        %336 = vmatpush1.xpose.msra.mxu0 0.0
        %337 = vmatprep.subr.mxu0 0.0
        %338 = vmatpush1.xpose.msra.mxu0 0.0
        %339 = vmatprep.subr.mxu0 0.0
        %340 = vmatpush1.xpose.msra.mxu0 0.0
        %341 = vmatprep.subr.mxu0 0.0
        %342 = vmatpush1.xpose.msra.mxu0 0.0
        %343 = vmatprep.subr.mxu0 0.0
        %344 = vmatpush1.xpose.msra.mxu0 0.0
        %345 = vmatprep.subr.mxu0 0.0
        %346 = vmatpush1.xpose.msra.mxu0 0.0
        %347 = vmatprep.subr.mxu0 0.0
        %348 = vmatpush1.xpose.msra.mxu0 0.0
        %349 = vmatprep.subr.mxu0 0.0
        %350 = vmatpush1.xpose.msra.mxu0 0.0
        %351 = vmatprep.subr.mxu0 0.0
        %352 = vmatpush1.xpose.msra.mxu0 0.0
        %353 = vmatprep.subr.mxu0 0.0
        %354 = vmatpush1.xpose.msra.mxu0 0.0
        %355 = vmatprep.subr.mxu0 0.0
        %356 = vmatpush1.xpose.msra.mxu0 0.0
        %357 = vmatprep.subr.mxu0 0.0
        %358 = vmatpush1.xpose.msra.mxu0 0.0
        %359 = vmatprep.subr.mxu0 0.0
        %360 = vmatpush1.xpose.msra.mxu0 0.0
        %361 = vmatprep.subr.mxu0 0.0
        %362 = vmatpush1.xpose.msra.mxu0 0.0
        %363 = vmatprep.subr.mxu0 0.0
        %364 = vmatpush1.xpose.msra.mxu0 0.0
        %365 = vmatprep.subr.mxu0 0.0
        %366 = vmatpush1.xpose.msra.mxu0 0.0
        %367 = vmatprep.subr.mxu0 0.0
        %368 = vmatpush1.xpose.msra.mxu0 0.0
        %369 = vmatprep.subr.mxu0 0.0
        %370 = vmatpush1.xpose.msra.mxu0 0.0
        %371 = vmatprep.subr.mxu0 0.0
        %372 = vmatpush1.xpose.msra.mxu0 0.0
        %373 = vmatprep.subr.mxu0 0.0
        %374 = vmatpush1.xpose.msra.mxu0 0.0
        %375 = vmatprep.mubr.f32.mxu0 %v300
        %376 = vmatmul.mubr.f32.gmra.mrb[0].mxu0 %v299
        %v377 = vpop.f32.mrb[0].mxu0
        %v378 = vadd.f32 0.0, %v377
        %v379 = vpop.f32.mrb[0].mxu0
        %380 = vmatprep.mubr.f32.mxu0 %v302
        %381 = vmatmul.mubr.f32.gmra.mrb[0].mxu0 %v301
        %v382 = vpop.f32.mrb[0].mxu0
        %v383 = vadd.f32 0.0, %v382
        %v384 = vpop.f32.mrb[0].mxu0
        %385 = vmatprep.mubr.f32.mxu0 %v304
        %386 = vmatmul.mubr.f32.gmra.mrb[0].mxu0 %v303
        %v387 = vpop.f32.mrb[0].mxu0
        %v388 = vadd.f32 0.0, %v387
        %v389 = vpop.f32.mrb[0].mxu0
        %390 = vmatprep.mubr.f32.mxu0 %v306
        %391 = vmatmul.mubr.f32.gmra.mrb[0].mxu0 %v305
        %v392 = vpop.f32.mrb[0].mxu0
        %v393 = vadd.f32 0.0, %v392
        %v394 = vpop.f32.mrb[0].mxu0
        %395 = vdwg.mxu0
        %vm396 = vcmask 31744
        %397 = vst.msk [vmem:[%s264] sm:$0xff] %vm396, %v378
        %398 = vst.msk [vmem:[%s264 + $0x8] sm:$0xff] %vm396, %v383
        %399 = vst.msk [vmem:[%s264 + $0x10] sm:$0xff] %vm396, %v388
        %400 = vst.msk [vmem:[%s264 + $0x18] sm:$0xff] %vm396, %v393
        %p401 = scmp.lt.s32.totalorder %s24, 1
        %s402 = scalar_select %p401, %s24, 1
        %p403 = scmp.lt.s32.totalorder %s25, 0
        %s404 = scalar_select %p403, %s25, 0
        %s405 = smul.addr %s402, 4
        %s406 = sadd.s32 %s404, %s405
        %s407 = smul.addr %s406, 8
        %s408 = scalar_lea.vmem %s3, %s407
        // Predicated region
        $region45: #{tpu_custom_call.1} parent=31 // pred_check
          %p409 = pneg %p127
        $region46: #{tpu_custom_call.1} parent=31 // pred_check_branch
          %411 = sbr.rel (%p409) target = $region48
        $region47: #{tpu_custom_call.1} parent=31 // pred_region
          _
        $region48: #{tpu_custom_call.1} parent=31 // pred_fallthru
          _
      $region32: #{tpu_custom_call.1} parent=5 // pred_fallthru
        _
      %p412 = scmp.le.s32.totalorder 2, %s15
      // Predicated region
      $region49: #{tpu_custom_call.1} parent=5 // pred_check
        %p413 = pneg %p412
      $region50: #{tpu_custom_call.1} parent=5 // pred_check_branch
        %415 = sbr.rel (%p413) target = $region52
      $region51: #{tpu_custom_call.1} parent=5 // pred_region
        %s416 = ssub.s32 %s15, 2
        // Predicated region
        $region53: #{tpu_custom_call.1} parent=51 // pred_check
          %p417 = pneg %p133
        $region54: #{tpu_custom_call.1} parent=51 // pred_check_branch
          %419 = sbr.rel (%p417) target = $region56
        $region55: #{tpu_custom_call.1} parent=51 // pred_region
          %p420 = scmp.lt.s32.totalorder %s26, 1
          %s421 = scalar_select %p420, %s26, 1
          %p422 = scmp.lt.s32.totalorder %s27, 0
          %s423 = scalar_select %p422, %s27, 0
          %s424 = smul.addr %s421, 4
          %s425 = sadd.s32 %s423, %s424
          %s426 = smul.addr %s425, 8
          %s427 = scalar_lea.vmem %s3, %s426
        $region56: #{tpu_custom_call.1} parent=51 // pred_fallthru
          _
      $region52: #{tpu_custom_call.1} parent=5 // pred_fallthru
        _
    $region6: #{tpu_custom_call.1} parent=1 // loop_footer
      %s19 = sadd.s32 1, %s15
    $region7: #{tpu_custom_call.1} parent=1 // loop_footer_branch
      %14 = sbr.rel target = $region3
    $region8: #{tpu_custom_call.1} parent=1 // loop_exit
      _
    %428 = vsyncpa [#allocation3], 1
    %s429 = scalar_lea.sflag [#allocation3], 1
    %430 = vsyncpa %s429, 1
    %431 = vsyncpa [#allocation5], 1
    %s432 = scalar_lea.sflag [#allocation5], 1
    %433 = vsyncpa %s432, 1

</llo_original>
